<compile_context>
chip_gen: v6e
topology: v6e:2x2x1
jax: 0.10.0
libtpu: 0.0.40
codegen_flags: <defaults>
</compile_context>

<pallas_src>
import jax
import jax.numpy as jnp
from jax import lax
from jax.experimental import pallas as pl
from jax.experimental.pallas import tpu as pltpu

N_ENC = 128
N_GOAL = 2
N_IN = N_ENC + N_GOAL        # 130
N_HID = 128
N_PRED = 30
N_COMP = 5                   # prob_output=True -> (mu_x, mu_y, sig_x, sig_y, rho)
N_OUT = N_PRED * N_COMP      # 150
GN_EPS = 1e-5                # nn.GroupNorm default eps
MAX_ROW_TILE = 1024          # per perf review: 512-1024 hits ~85% of HBM roofline
MIN_GRID_STEPS = 4           # keep the parallel axis shardable across v7x's 2 TCs


def _round_up(x, m):
    return (x + m - 1) // m * m


def _group_norm(h, gamma, beta):
    """GroupNorm, single group over all 128 channels (per-row LN + affine).
    One-pass variance so the two cross-lane (XLU) reductions issue back-to-back.
    NOTE: E[h^2]-E[h]^2 can lose precision by cancellation when |mean| >> std; fine
    here since the pre-GN activations are O(1)."""
    m = jnp.mean(h, axis=-1, keepdims=True)
    m2 = jnp.mean(h * h, axis=-1, keepdims=True)
    var = jnp.maximum(m2 - m * m, 0.0)
    return (h - m) * lax.rsqrt(var + GN_EPS) * gamma + beta


def _traj_completor_kernel(x_ref, wenc_ref, head_ref, aff_ref, w2_ref, wd_ref,
                           out_ref):
    x = x_ref[...]                                  # (T, 130) bf16
    x_enc = x[:, :N_ENC]                            # (T, 128) bf16, lane-aligned slice
    goal = x[:, N_ENC:].astype(jnp.float32)         # (T, 2)  f32

    # head rows: 0 = [b1 | 0]  (Linear_t has bias=False in LinearRes' transform),
    #            1 = fused-weight row for goal_x, 2 = row for goal_y (kept f32).
    head = head_ref[...]                            # (3, 256) f32

    # Fused first layer [Linear1 | Linear_t]: one K=128 MXU pass over the encoder
    # columns + a rank-2 VPU broadcast-FMA for the two goal columns.
    za = jnp.dot(x_enc, wenc_ref[...], preferred_element_type=jnp.float32)
    za = (za + head[0:1, :]
          + goal[:, 0:1] * head[1:2, :]
          + goal[:, 1:2] * head[2:3, :])            # (T, 256) f32
    z1 = za[:, :N_HID]                              # Linear1(x) + b1 (vreg-aligned split)
    zt = za[:, N_HID:]                              # Linear_t(x)

    aff = aff_ref[...]                              # (8, 128) f32 packed affines / biases
    g1, be1 = aff[0:1], aff[1:2]
    b2 = aff[2:3]
    g2, be2 = aff[3:4], aff[4:5]
    gt, bet = aff[5:6], aff[6:7]

    h1 = jnp.maximum(_group_norm(z1, g1, be1), 0.0)
    h2 = jnp.dot(h1.astype(jnp.bfloat16), w2_ref[...],
                 preferred_element_type=jnp.float32) + b2
    h2 = _group_norm(h2, g2, be2)
    res = _group_norm(zt, gt, bet)
    h = jnp.maximum(h2 + res, 0.0)

    # Dropout: inference / eval mode -> identity.
    # TODO(synk): training-mode dropout (stateful PRNG mask) not emitted here.

    # --- fc_d (bias=False) ---
    y = jnp.dot(h.astype(jnp.bfloat16), wd_ref[...],
                preferred_element_type=jnp.float32)                 # (T, 150) f32

    # prob_traj_output on the flat (rows, 30*5) slab: component = col % 5.
    # Single EUP exp: sigma lanes use exp(y) (may overflow to +inf exactly like
    # torch.exp); rho lanes use exp(clip(2y)) so tanh = 1 - 2/(exp(2y)+1) can never
    # turn into inf/inf -> NaN.  Discarded mu lanes stay finite under jnp.where.
    comp = lax.broadcasted_iota(jnp.int32, y.shape, 1) % N_COMP
    z = jnp.where(comp == 4, jnp.clip(2.0 * y, -60.0, 60.0), y)
    e = jnp.exp(z)
    tanh_y = 1.0 - 2.0 * pl.reciprocal(e + 1.0, approx=True)
    y = jnp.where(comp < 2, y,                       # mu_x, mu_y  : identity
                  jnp.where(comp < 4, e,             # sig_x, sig_y: exp
                            tanh_y))                 # rho         : tanh
    out_ref[...] = y.astype(out_ref.dtype)


def init_params(key):
    """Deterministic synthetic parameters matching the PyTorch module shapes.
    Linear weights stored transposed as (in_features, out_features), f32."""
    ks = jax.random.split(key, 8)

    def lin_w(k, n_in, n_out):
        bound = 1.0 / jnp.sqrt(jnp.float32(n_in))
        return jax.random.uniform(k, (n_in, n_out), jnp.float32, -bound, bound)

    def lin_b(k, n_in, n_out):
        bound = 1.0 / jnp.sqrt(jnp.float32(n_in))
        return jax.random.uniform(k, (1, n_out), jnp.float32, -bound, bound)

    return dict(
        w1=lin_w(ks[0], N_IN, N_HID), b1=lin_b(ks[1], N_IN, N_HID),
        g1=jnp.ones((1, N_HID), jnp.float32), be1=jnp.zeros((1, N_HID), jnp.float32),
        w2=lin_w(ks[2], N_HID, N_HID), b2=lin_b(ks[3], N_HID, N_HID),
        g2=jnp.ones((1, N_HID), jnp.float32), be2=jnp.zeros((1, N_HID), jnp.float32),
        wt=lin_w(ks[4], N_IN, N_HID),   # transform branch: bias=False in LinearRes
        gt=jnp.ones((1, N_HID), jnp.float32), bet=jnp.zeros((1, N_HID), jnp.float32),
        wd=lin_w(ks[5], N_HID, N_OUT),
    )


def prepare_params(params):
    """Kernel-ready parameters:
       wenc : (128, 256) bf16  - encoder rows of [w1 | wt] fused
       head : (3, 256)  f32    - row0 = [b1 | 0], rows1-2 = goal-column weights
       aff  : (8, 128)  f32    - g1, be1, b2, g2, be2, gt, bet, pad
       w2   : (128, 128) bf16, wd : (128, 150) bf16."""
    wa = jnp.concatenate([params["w1"], params["wt"]], axis=1)        # (130, 256) f32
    wenc = wa[:N_ENC].astype(jnp.bfloat16)
    head = jnp.concatenate(
        [jnp.concatenate([params["b1"], jnp.zeros((1, N_HID), jnp.float32)], axis=1),
         wa[N_ENC:N_ENC + 1], wa[N_ENC + 1:N_ENC + 2]], axis=0)       # (3, 256) f32
    aff = jnp.concatenate(
        [params["g1"], params["be1"], params["b2"], params["g2"], params["be2"],
         params["gt"], params["bet"], jnp.zeros((1, N_HID), jnp.float32)], axis=0)
    return dict(
        wenc=wenc, head=head, aff=aff,
        w2=params["w2"].astype(jnp.bfloat16),
        wd=params["wd"].astype(jnp.bfloat16),
    )


@jax.jit
def traj_completor_forward(traj_enc, goal, kp):
    """traj_enc: (B, 128) f32, goal: (B, M, 2) f32 -> (B, M, 30, 5) f32."""
    B, M = goal.shape[0], goal.shape[1]
    n_rows = B * M

    # Glue: cat([traj_enc.unsqueeze(1).repeat(1, M, 1), goal], -1).reshape(-1, 130),
    # cast to bf16 so the kernel-side input DMA is halved.
    # TODO(synk): for large B, a 2-D (batch, mode) grid with separate traj_enc/goal
    # inputs would avoid this HBM round-trip (~1.7x less traffic); kept the flat path
    # for lowering safety and small-B workloads.
    x = jnp.concatenate(
        [jnp.broadcast_to(traj_enc[:, None, :].astype(jnp.float32), (B, M, N_ENC)),
         goal.astype(jnp.float32)], axis=-1
    ).reshape(n_rows, N_IN).astype(jnp.bfloat16)

    # Row tile: as large as possible (memory-bound, ~0.35 us fixed cost per grid step)
    # but keep >= MIN_GRID_STEPS steps whenever rows allow so the "parallel" axis can
    # shard across v7x's two TensorCores.
    if n_rows <= 8:
        row_tile = 8
    else:
        row_tile = min(MAX_ROW_TILE, _round_up(pl.cdiv(n_rows, MIN_GRID_STEPS), 8))
    n_pad = _round_up(n_rows, row_tile)
    x = jnp.pad(x, ((0, n_pad - n_rows), (0, 0)))

    full = lambda shape: pl.BlockSpec(shape, lambda i: (0, 0))

    out_flat = pl.pallas_call(
        _traj_completor_kernel,
        out_shape=jax.ShapeDtypeStruct((n_pad, N_OUT), jnp.float32),
        grid_spec=pltpu.PrefetchScalarGridSpec(
            num_scalar_prefetch=0,
            grid=(n_pad // row_tile,),
            in_specs=[
                pl.BlockSpec((row_tile, N_IN), lambda i: (i, 0)),   # x rows
                full((N_ENC, 2 * N_HID)),                           # wenc
                full((3, 2 * N_HID)),                               # head (bias + goal w)
                full((8, N_HID)),                                   # packed affines
                full((N_HID, N_HID)),                               # w2
                full((N_HID, N_OUT)),                               # wd
            ],
            out_specs=pl.BlockSpec((row_tile, N_OUT), lambda i: (i, 0)),
        ),
        compiler_params=pltpu.CompilerParams(
            dimension_semantics=("parallel",),
            vmem_limit_bytes=32 * 1024 * 1024),      # headroom over v5e's 16 MiB default
    )(x, kp["wenc"], kp["head"], kp["aff"], kp["w2"], kp["wd"])

    return out_flat[:n_rows].reshape(B, M, N_PRED, N_COMP)


def _reference_forward(traj_enc, goal, kp):
    """Pure-JAX reference of the same math (same bf16 operand casts, fused weights)."""
    B, M = goal.shape[0], goal.shape[1]
    enc = jnp.broadcast_to(traj_enc[:, None, :], (B, M, N_ENC)).reshape(-1, N_ENC)
    enc = enc.astype(jnp.bfloat16)
    g = goal.reshape(-1, N_GOAL).astype(jnp.bfloat16).astype(jnp.float32)

    def gn(h, gamma, beta):
        m = h.mean(-1, keepdims=True)
        m2 = (h * h).mean(-1, keepdims=True)
        var = jnp.maximum(m2 - m * m, 0.0)
        return (h - m) * lax.rsqrt(var + GN_EPS) * gamma + beta

    head, aff = kp["head"], kp["aff"]
    za = jnp.dot(enc, kp["wenc"], preferred_element_type=jnp.float32)
    za = za + head[0:1] + g[:, 0:1] * head[1:2] + g[:, 1:2] * head[2:3]
    z1, zt = za[:, :N_HID], za[:, N_HID:]
    h1 = jnp.maximum(gn(z1, aff[0:1], aff[1:2]), 0.0)
    h2 = gn(jnp.dot(h1.astype(jnp.bfloat16), kp["w2"],
                    preferred_element_type=jnp.float32) + aff[2:3],
            aff[3:4], aff[4:5])
    res = gn(zt, aff[5:6], aff[6:7])
    h = jnp.maximum(h2 + res, 0.0)
    y = jnp.dot(h.astype(jnp.bfloat16), kp["wd"],
                preferred_element_type=jnp.float32).reshape(B, M, N_PRED, N_COMP)
    return jnp.concatenate(
        [y[..., 0:2], jnp.exp(y[..., 2:4]), jnp.tanh(y[..., 4:5])], axis=-1)


if __name__ == "__main__":
    key = jax.random.PRNGKey(0)
    k_p, k_enc, k_goal, k_enc2, k_goal2 = jax.random.split(key, 5)

    params = init_params(k_p)
    kp = prepare_params(params)

    # Small shape (single-batch of grid steps, exercises row padding).
    B, M = 2, 6
    traj_enc = jax.random.normal(k_enc, (B, N_ENC), jnp.float32)
    goal = jax.random.normal(k_goal, (B, M, N_GOAL), jnp.float32)
    out = jax.block_until_ready(traj_completor_forward(traj_enc, goal, kp))
    ref = _reference_forward(traj_enc, goal, kp)
    assert out.shape == (B, M, N_PRED, N_COMP), out.shape
    assert jnp.allclose(out, ref, atol=1e-2, rtol=1e-2), "mismatch vs reference (small)"

    # Moderate shape: multi-step grid (row_tile clamp / parallel axis path).
    B2, M2 = 64, 6
    traj_enc2 = jax.random.normal(k_enc2, (B2, N_ENC), jnp.float32)
    goal2 = jax.random.normal(k_goal2, (B2, M2, N_GOAL), jnp.float32)
    out2 = jax.block_until_ready(traj_completor_forward(traj_enc2, goal2, kp))
    ref2 = _reference_forward(traj_enc2, goal2, kp)
    assert out2.shape == (B2, M2, N_PRED, N_COMP), out2.shape
    assert jnp.allclose(out2, ref2, atol=1e-2, rtol=1e-2), "mismatch vs reference (large)"

    print("KERNEL_OK")
</pallas_src>

<mosaic_0001>
module attributes {stable_mosaic.version = 11 : i64} {
  func.func @_traj_completor_kernel(%arg0: i32, %arg1: memref<8x130xbf16, #tpu.memory_space<vmem>>, %arg2: memref<128x256xbf16, #tpu.memory_space<vmem>>, %arg3: memref<3x256xf32, #tpu.memory_space<vmem>>, %arg4: memref<8x128xf32, #tpu.memory_space<vmem>>, %arg5: memref<128x128xbf16, #tpu.memory_space<vmem>>, %arg6: memref<128x150xbf16, #tpu.memory_space<vmem>>, %arg7: memref<8x150xf32, #tpu.memory_space<vmem>>) attributes {dimension_semantics = [#tpu.dimension_semantics<parallel>], iteration_bounds = array<i64: 2>, scalar_prefetch = 0 : i64, scratch_operands = 0 : i64, tpu.core_type = #tpu.core_type<tc>, window_params = [{transform_indices = @transform_0, window_bounds = array<i64: 8, 130>}, {pipeline_mode = #tpu.pipeline_mode<synchronous>, transform_indices = @transform_1, window_bounds = array<i64: 128, 256>}, {pipeline_mode = #tpu.pipeline_mode<synchronous>, transform_indices = @transform_2, window_bounds = array<i64: 3, 256>}, {pipeline_mode = #tpu.pipeline_mode<synchronous>, transform_indices = @transform_3, window_bounds = array<i64: 8, 128>}, {pipeline_mode = #tpu.pipeline_mode<synchronous>, transform_indices = @transform_4, window_bounds = array<i64: 128, 128>}, {pipeline_mode = #tpu.pipeline_mode<synchronous>, transform_indices = @transform_5, window_bounds = array<i64: 128, 150>}, {transform_indices = @transform_6, window_bounds = array<i64: 8, 150>}]} {
    %c0 = arith.constant 0 : index
    %c0_0 = arith.constant 0 : index
    %0 = vector.load %arg1[%c0, %c0_0] : memref<8x130xbf16, #tpu.memory_space<vmem>>, vector<8x130xbf16>
    %1 = vector.extract_strided_slice %0 {offsets = [0, 0], sizes = [8, 128], strides = [1, 1]} : vector<8x130xbf16> to vector<8x128xbf16>
    %2 = vector.extract_strided_slice %0 {offsets = [0, 128], sizes = [8, 2], strides = [1, 1]} : vector<8x130xbf16> to vector<8x2xbf16>
    %3 = arith.extf %2 : vector<8x2xbf16> to vector<8x2xf32>
    %c0_1 = arith.constant 0 : index
    %c0_2 = arith.constant 0 : index
    %4 = vector.load %arg3[%c0_1, %c0_2] : memref<3x256xf32, #tpu.memory_space<vmem>>, vector<3x256xf32>
    %c0_3 = arith.constant 0 : index
    %c0_4 = arith.constant 0 : index
    %5 = vector.load %arg2[%c0_3, %c0_4] : memref<128x256xbf16, #tpu.memory_space<vmem>>, vector<128x256xbf16>
    %cst = arith.constant dense<0.000000e+00> : vector<8x256xf32>
    %6 = tpu.matmul %1, %5, %cst {dimension_numbers = #tpu.dot_dimension_numbers<[1], [0], [0], [1], [0, 0, 1, 1], [], []>} : vector<8x128xbf16>, vector<128x256xbf16>, vector<8x256xf32> -> vector<8x256xf32>
    %7 = vector.extract_strided_slice %4 {offsets = [0, 0], sizes = [1, 256], strides = [1, 1]} : vector<3x256xf32> to vector<1x256xf32>
    %8 = vector.broadcast %7 : vector<1x256xf32> to vector<8x256xf32>
    %9 = arith.addf %6, %8 : vector<8x256xf32>
    %10 = vector.extract_strided_slice %3 {offsets = [0, 0], sizes = [8, 1], strides = [1, 1]} : vector<8x2xf32> to vector<8x1xf32>
    %11 = vector.extract_strided_slice %4 {offsets = [1, 0], sizes = [1, 256], strides = [1, 1]} : vector<3x256xf32> to vector<1x256xf32>
    %12 = vector.broadcast %10 : vector<8x1xf32> to vector<8x256xf32>
    %13 = vector.broadcast %11 : vector<1x256xf32> to vector<8x256xf32>
    %14 = arith.mulf %12, %13 : vector<8x256xf32>
    %15 = arith.addf %9, %14 : vector<8x256xf32>
    %16 = vector.extract_strided_slice %3 {offsets = [0, 1], sizes = [8, 1], strides = [1, 1]} : vector<8x2xf32> to vector<8x1xf32>
    %17 = vector.extract_strided_slice %4 {offsets = [2, 0], sizes = [1, 256], strides = [1, 1]} : vector<3x256xf32> to vector<1x256xf32>
    %18 = vector.broadcast %16 : vector<8x1xf32> to vector<8x256xf32>
    %19 = vector.broadcast %17 : vector<1x256xf32> to vector<8x256xf32>
    %20 = arith.mulf %18, %19 : vector<8x256xf32>
    %21 = arith.addf %15, %20 : vector<8x256xf32>
    %22 = vector.extract_strided_slice %21 {offsets = [0, 0], sizes = [8, 128], strides = [1, 1]} : vector<8x256xf32> to vector<8x128xf32>
    %23 = vector.extract_strided_slice %21 {offsets = [0, 128], sizes = [8, 128], strides = [1, 1]} : vector<8x256xf32> to vector<8x128xf32>
    %c0_5 = arith.constant 0 : index
    %c0_6 = arith.constant 0 : index
    %24 = vector.load %arg4[%c0_5, %c0_6] : memref<8x128xf32, #tpu.memory_space<vmem>>, vector<8x128xf32>
    %25 = vector.extract_strided_slice %24 {offsets = [0, 0], sizes = [1, 128], strides = [1, 1]} : vector<8x128xf32> to vector<1x128xf32>
    %26 = vector.extract_strided_slice %24 {offsets = [1, 0], sizes = [1, 128], strides = [1, 1]} : vector<8x128xf32> to vector<1x128xf32>
    %27 = vector.extract_strided_slice %24 {offsets = [2, 0], sizes = [1, 128], strides = [1, 1]} : vector<8x128xf32> to vector<1x128xf32>
    %28 = vector.extract_strided_slice %24 {offsets = [3, 0], sizes = [1, 128], strides = [1, 1]} : vector<8x128xf32> to vector<1x128xf32>
    %29 = vector.extract_strided_slice %24 {offsets = [4, 0], sizes = [1, 128], strides = [1, 1]} : vector<8x128xf32> to vector<1x128xf32>
    %30 = vector.extract_strided_slice %24 {offsets = [5, 0], sizes = [1, 128], strides = [1, 1]} : vector<8x128xf32> to vector<1x128xf32>
    %31 = vector.extract_strided_slice %24 {offsets = [6, 0], sizes = [1, 128], strides = [1, 1]} : vector<8x128xf32> to vector<1x128xf32>
    %cst_7 = arith.constant dense<0.000000e+00> : vector<8xf32>
    %32 = vector.multi_reduction <add>, %22, %cst_7 [1] : vector<8x128xf32> to vector<8xf32>
    %33 = vector.shape_cast %32 : vector<8xf32> to vector<8x1xf32>
    %cst_8 = arith.constant 1.280000e+02 : f32
    %34 = vector.broadcast %cst_8 : f32 to vector<8x1xf32>
    %35 = arith.divf %33, %34 : vector<8x1xf32>
    %36 = arith.mulf %22, %22 : vector<8x128xf32>
    %cst_9 = arith.constant dense<0.000000e+00> : vector<8xf32>
    %37 = vector.multi_reduction <add>, %36, %cst_9 [1] : vector<8x128xf32> to vector<8xf32>
    %38 = vector.shape_cast %37 : vector<8xf32> to vector<8x1xf32>
    %cst_10 = arith.constant 1.280000e+02 : f32
    %39 = vector.broadcast %cst_10 : f32 to vector<8x1xf32>
    %40 = arith.divf %38, %39 : vector<8x1xf32>
    %41 = arith.mulf %35, %35 : vector<8x1xf32>
    %42 = arith.subf %40, %41 : vector<8x1xf32>
    %cst_11 = arith.constant 0.000000e+00 : f32
    %43 = vector.broadcast %cst_11 : f32 to vector<8x1xf32>
    %44 = arith.maximumf %42, %43 : vector<8x1xf32>
    %45 = vector.broadcast %35 : vector<8x1xf32> to vector<8x128xf32>
    %46 = arith.subf %22, %45 : vector<8x128xf32>
    %cst_12 = arith.constant 9.99999974E-6 : f32
    %47 = vector.broadcast %cst_12 : f32 to vector<8x1xf32>
    %48 = arith.addf %44, %47 : vector<8x1xf32>
    %49 = math.rsqrt %48 : vector<8x1xf32>
    %50 = vector.broadcast %49 : vector<8x1xf32> to vector<8x128xf32>
    %51 = arith.mulf %46, %50 : vector<8x128xf32>
    %52 = vector.broadcast %25 : vector<1x128xf32> to vector<8x128xf32>
    %53 = arith.mulf %51, %52 : vector<8x128xf32>
    %54 = vector.broadcast %26 : vector<1x128xf32> to vector<8x128xf32>
    %55 = arith.addf %53, %54 : vector<8x128xf32>
    %cst_13 = arith.constant 0.000000e+00 : f32
    %56 = vector.broadcast %cst_13 : f32 to vector<8x128xf32>
    %57 = arith.maximumf %55, %56 : vector<8x128xf32>
    %58 = arith.truncf %57 : vector<8x128xf32> to vector<8x128xbf16>
    %c0_14 = arith.constant 0 : index
    %c0_15 = arith.constant 0 : index
    %59 = vector.load %arg5[%c0_14, %c0_15] : memref<128x128xbf16, #tpu.memory_space<vmem>>, vector<128x128xbf16>
    %cst_16 = arith.constant dense<0.000000e+00> : vector<8x128xf32>
    %60 = tpu.matmul %58, %59, %cst_16 {dimension_numbers = #tpu.dot_dimension_numbers<[1], [0], [0], [1], [0, 0, 1, 1], [], []>} : vector<8x128xbf16>, vector<128x128xbf16>, vector<8x128xf32> -> vector<8x128xf32>
    %61 = vector.broadcast %27 : vector<1x128xf32> to vector<8x128xf32>
    %62 = arith.addf %60, %61 : vector<8x128xf32>
    %cst_17 = arith.constant dense<0.000000e+00> : vector<8xf32>
    %63 = vector.multi_reduction <add>, %62, %cst_17 [1] : vector<8x128xf32> to vector<8xf32>
    %64 = vector.shape_cast %63 : vector<8xf32> to vector<8x1xf32>
    %cst_18 = arith.constant 1.280000e+02 : f32
    %65 = vector.broadcast %cst_18 : f32 to vector<8x1xf32>
    %66 = arith.divf %64, %65 : vector<8x1xf32>
    %67 = arith.mulf %62, %62 : vector<8x128xf32>
    %cst_19 = arith.constant dense<0.000000e+00> : vector<8xf32>
    %68 = vector.multi_reduction <add>, %67, %cst_19 [1] : vector<8x128xf32> to vector<8xf32>
    %69 = vector.shape_cast %68 : vector<8xf32> to vector<8x1xf32>
    %cst_20 = arith.constant 1.280000e+02 : f32
    %70 = vector.broadcast %cst_20 : f32 to vector<8x1xf32>
    %71 = arith.divf %69, %70 : vector<8x1xf32>
    %72 = arith.mulf %66, %66 : vector<8x1xf32>
    %73 = arith.subf %71, %72 : vector<8x1xf32>
    %cst_21 = arith.constant 0.000000e+00 : f32
    %74 = vector.broadcast %cst_21 : f32 to vector<8x1xf32>
    %75 = arith.maximumf %73, %74 : vector<8x1xf32>
    %76 = vector.broadcast %66 : vector<8x1xf32> to vector<8x128xf32>
    %77 = arith.subf %62, %76 : vector<8x128xf32>
    %cst_22 = arith.constant 9.99999974E-6 : f32
    %78 = vector.broadcast %cst_22 : f32 to vector<8x1xf32>
    %79 = arith.addf %75, %78 : vector<8x1xf32>
    %80 = math.rsqrt %79 : vector<8x1xf32>
    %81 = vector.broadcast %80 : vector<8x1xf32> to vector<8x128xf32>
    %82 = arith.mulf %77, %81 : vector<8x128xf32>
    %83 = vector.broadcast %28 : vector<1x128xf32> to vector<8x128xf32>
    %84 = arith.mulf %82, %83 : vector<8x128xf32>
    %85 = vector.broadcast %29 : vector<1x128xf32> to vector<8x128xf32>
    %86 = arith.addf %84, %85 : vector<8x128xf32>
    %cst_23 = arith.constant dense<0.000000e+00> : vector<8xf32>
    %87 = vector.multi_reduction <add>, %23, %cst_23 [1] : vector<8x128xf32> to vector<8xf32>
    %88 = vector.shape_cast %87 : vector<8xf32> to vector<8x1xf32>
    %cst_24 = arith.constant 1.280000e+02 : f32
    %89 = vector.broadcast %cst_24 : f32 to vector<8x1xf32>
    %90 = arith.divf %88, %89 : vector<8x1xf32>
    %91 = arith.mulf %23, %23 : vector<8x128xf32>
    %cst_25 = arith.constant dense<0.000000e+00> : vector<8xf32>
    %92 = vector.multi_reduction <add>, %91, %cst_25 [1] : vector<8x128xf32> to vector<8xf32>
    %93 = vector.shape_cast %92 : vector<8xf32> to vector<8x1xf32>
    %cst_26 = arith.constant 1.280000e+02 : f32
    %94 = vector.broadcast %cst_26 : f32 to vector<8x1xf32>
    %95 = arith.divf %93, %94 : vector<8x1xf32>
    %96 = arith.mulf %90, %90 : vector<8x1xf32>
    %97 = arith.subf %95, %96 : vector<8x1xf32>
    %cst_27 = arith.constant 0.000000e+00 : f32
    %98 = vector.broadcast %cst_27 : f32 to vector<8x1xf32>
    %99 = arith.maximumf %97, %98 : vector<8x1xf32>
    %100 = vector.broadcast %90 : vector<8x1xf32> to vector<8x128xf32>
    %101 = arith.subf %23, %100 : vector<8x128xf32>
    %cst_28 = arith.constant 9.99999974E-6 : f32
    %102 = vector.broadcast %cst_28 : f32 to vector<8x1xf32>
    %103 = arith.addf %99, %102 : vector<8x1xf32>
    %104 = math.rsqrt %103 : vector<8x1xf32>
    %105 = vector.broadcast %104 : vector<8x1xf32> to vector<8x128xf32>
    %106 = arith.mulf %101, %105 : vector<8x128xf32>
    %107 = vector.broadcast %30 : vector<1x128xf32> to vector<8x128xf32>
    %108 = arith.mulf %106, %107 : vector<8x128xf32>
    %109 = vector.broadcast %31 : vector<1x128xf32> to vector<8x128xf32>
    %110 = arith.addf %108, %109 : vector<8x128xf32>
    %111 = arith.addf %86, %110 : vector<8x128xf32>
    %cst_29 = arith.constant 0.000000e+00 : f32
    %112 = vector.broadcast %cst_29 : f32 to vector<8x128xf32>
    %113 = arith.maximumf %111, %112 : vector<8x128xf32>
    %114 = arith.truncf %113 : vector<8x128xf32> to vector<8x128xbf16>
    %c0_30 = arith.constant 0 : index
    %c0_31 = arith.constant 0 : index
    %115 = vector.load %arg6[%c0_30, %c0_31] : memref<128x150xbf16, #tpu.memory_space<vmem>>, vector<128x150xbf16>
    %cst_32 = arith.constant dense<0.000000e+00> : vector<8x150xf32>
    %116 = tpu.matmul %114, %115, %cst_32 {dimension_numbers = #tpu.dot_dimension_numbers<[1], [0], [0], [1], [0, 0, 1, 1], [], []>} : vector<8x128xbf16>, vector<128x150xbf16>, vector<8x150xf32> -> vector<8x150xf32>
    %117 = tpu.iota {dimensions = array<i32: 1>} : vector<8x150xi32>
    %c5_i32 = arith.constant 5 : i32
    %c0_i32 = arith.constant 0 : i32
    %118 = arith.cmpi eq, %c5_i32, %c0_i32 : i32
    %c1_i32 = arith.constant 1 : i32
    %119 = arith.select %118, %c1_i32, %c5_i32 : i32
    %120 = vector.broadcast %119 : i32 to vector<8x150xi32>
    %121 = arith.remsi %117, %120 : vector<8x150xi32>
    %c0_i32_33 = arith.constant 0 : i32
    %122 = vector.broadcast %c0_i32_33 : i32 to vector<8x150xi32>
    %123 = arith.cmpi ne, %121, %122 : vector<8x150xi32>
    %c0_i32_34 = arith.constant 0 : i32
    %124 = vector.broadcast %c0_i32_34 : i32 to vector<8x150xi32>
    %125 = arith.cmpi slt, %121, %124 : vector<8x150xi32>
    %c0_i32_35 = arith.constant 0 : i32
    %126 = arith.cmpi slt, %119, %c0_i32_35 : i32
    %127 = vector.broadcast %126 : i1 to vector<8x150xi1>
    %128 = vector.broadcast %127 : vector<8x150xi1> to vector<8x150xi1>
    %129 = arith.xori %125, %128 : vector<8x150xi1>
    %130 = arith.andi %129, %123 : vector<8x150xi1>
    %131 = vector.broadcast %119 : i32 to vector<8x150xi32>
    %132 = arith.addi %121, %131 : vector<8x150xi32>
    %133 = arith.select %130, %132, %121 : vector<8x150xi1>, vector<8x150xi32>
    %c4_i32 = arith.constant 4 : i32
    %134 = vector.broadcast %c4_i32 : i32 to vector<8x150xi32>
    %135 = arith.cmpi eq, %133, %134 : vector<8x150xi32>
    %cst_36 = arith.constant 2.000000e+00 : f32
    %136 = vector.broadcast %cst_36 : f32 to vector<8x150xf32>
    %137 = arith.mulf %136, %116 : vector<8x150xf32>
    %cst_37 = arith.constant -6.000000e+01 : f32
    %cst_38 = arith.constant 6.000000e+01 : f32
    %138 = vector.broadcast %cst_37 : f32 to vector<8x150xf32>
    %139 = arith.maximumf %138, %137 : vector<8x150xf32>
    %140 = vector.broadcast %cst_38 : f32 to vector<8x150xf32>
    %141 = arith.minimumf %140, %139 : vector<8x150xf32>
    %142 = arith.select %135, %141, %116 : vector<8x150xi1>, vector<8x150xf32>
    %143 = math.exp %142 : vector<8x150xf32>
    %cst_39 = arith.constant 1.000000e+00 : f32
    %144 = vector.broadcast %cst_39 : f32 to vector<8x150xf32>
    %145 = arith.addf %143, %144 : vector<8x150xf32>
    %146 = tpu.reciprocal %145 {approx = true} : vector<8x150xf32> -> vector<8x150xf32>
    %cst_40 = arith.constant 2.000000e+00 : f32
    %147 = vector.broadcast %cst_40 : f32 to vector<8x150xf32>
    %148 = arith.mulf %147, %146 : vector<8x150xf32>
    %cst_41 = arith.constant 1.000000e+00 : f32
    %149 = vector.broadcast %cst_41 : f32 to vector<8x150xf32>
    %150 = arith.subf %149, %148 : vector<8x150xf32>
    %c2_i32 = arith.constant 2 : i32
    %151 = vector.broadcast %c2_i32 : i32 to vector<8x150xi32>
    %152 = arith.cmpi slt, %133, %151 : vector<8x150xi32>
    %c4_i32_42 = arith.constant 4 : i32
    %153 = vector.broadcast %c4_i32_42 : i32 to vector<8x150xi32>
    %154 = arith.cmpi slt, %133, %153 : vector<8x150xi32>
    %155 = arith.select %154, %143, %150 : vector<8x150xi1>, vector<8x150xf32>
    %156 = arith.select %152, %116, %155 : vector<8x150xi1>, vector<8x150xf32>
    %c0_43 = arith.constant 0 : index
    %c0_44 = arith.constant 0 : index
    %157 = vector.load %arg7[%c0_43, %c0_44] : memref<8x150xf32, #tpu.memory_space<vmem>>, vector<8x150xf32>
    tpu.vector_store %arg7[%c0_43, %c0_44], %156 {strides = array<i32>} : memref<8x150xf32, #tpu.memory_space<vmem>>, vector<8x150xf32>,
    return
  }
  func.func @transform_0(%arg0: i32) -> (i32, i32) {
    %c0_i32 = arith.constant 0 : i32
    %c0_i32_0 = arith.constant 0 : i32
    return %arg0, %c0_i32 : i32, i32
  }
  func.func @transform_1(%arg0: i32) -> (i32, i32) {
    %c0_i32 = arith.constant 0 : i32
    %c0_i32_0 = arith.constant 0 : i32
    %c0_i32_1 = arith.constant 0 : i32
    return %c0_i32, %c0_i32_0 : i32, i32
  }
  func.func @transform_2(%arg0: i32) -> (i32, i32) {
    %c0_i32 = arith.constant 0 : i32
    %c0_i32_0 = arith.constant 0 : i32
    %c0_i32_1 = arith.constant 0 : i32
    return %c0_i32, %c0_i32_0 : i32, i32
  }
  func.func @transform_3(%arg0: i32) -> (i32, i32) {
    %c0_i32 = arith.constant 0 : i32
    %c0_i32_0 = arith.constant 0 : i32
    %c0_i32_1 = arith.constant 0 : i32
    return %c0_i32, %c0_i32_0 : i32, i32
  }
  func.func @transform_4(%arg0: i32) -> (i32, i32) {
    %c0_i32 = arith.constant 0 : i32
    %c0_i32_0 = arith.constant 0 : i32
    %c0_i32_1 = arith.constant 0 : i32
    return %c0_i32, %c0_i32_0 : i32, i32
  }
  func.func @transform_5(%arg0: i32) -> (i32, i32) {
    %c0_i32 = arith.constant 0 : i32
    %c0_i32_0 = arith.constant 0 : i32
    %c0_i32_1 = arith.constant 0 : i32
    return %c0_i32, %c0_i32_0 : i32, i32
  }
  func.func @transform_6(%arg0: i32) -> (i32, i32) {
    %c0_i32 = arith.constant 0 : i32
    %c0_i32_0 = arith.constant 0 : i32
    return %arg0, %c0_i32 : i32, i32
  }
}

</mosaic_0001>

<llo_original>
// kernel: traj_completor_forward.1
$region0: #{traj_completor_forward.1}
  #allocation0 [shape = 'u32[]', space=smem, size = 0x4, offset = 0x4, fixed_abs, tag = 'smem constant byte address 0x4 - core index']
  #allocation1 [shape = 'u32[144,128]{1,0:T(1,128)}', space=vmem, size = 0x12000, scoped, tag = 'internal scratch']
  %s0 = inlined_call_operand.vmem [shape: bf16[16,130], index: 0, kind: input, shape index: {}]
  %s1 = inlined_call_operand.vmem [shape: bf16[128,256], index: 1, kind: input, shape index: {}]
  %s2 = inlined_call_operand.vmem [shape: f32[3,256], index: 2, kind: input, shape index: {}]
  %s3 = inlined_call_operand.vmem [shape: f32[8,128], index: 3, kind: input, shape index: {}]
  %s4 = inlined_call_operand.vmem [shape: bf16[128,128], index: 4, kind: input, shape index: {}]
  %s5 = inlined_call_operand.vmem [shape: bf16[128,150], index: 5, kind: input, shape index: {}]
  %s6 = inlined_call_operand.vmem [shape: f32[16,150], index: 6, kind: output, shape index: {}]
  %s7 = sld [smem:[#allocation0]]
  $region57: #{traj_completor_forward.1} parent=0
    _
  %s9 = ssub.s32 1, %s7
  %s10 = scalar_select 0, %s9, %s7
  loop: start=0, step=1, limit=4
  $region2: #{traj_completor_forward.1} parent=0 // loop_pre_header
    _
  $region3: #{traj_completor_forward.1} parent=0 // loop_header
    %s12 = sphi 0, %s16
    %p13 = scmp.ge.s32.totalorder %s12, 4
    %s22 = sphi 0, %s24
    %s25 = sphi 0, %s22
    %s26 = sphi 0, %s25
    %s42 = sphi 0, %s26
    %s46 = sphi 0, %s46
    %s48 = sphi 0, %s46
    %s49 = sphi 0, %s48
    %s63 = sphi 0, %s49
    %s67 = sphi 0, %s67
    %s69 = sphi 0, %s67
    %s70 = sphi 0, %s69
    %s84 = sphi 0, %s70
    %s88 = sphi 0, %s88
    %s90 = sphi 0, %s88
    %s91 = sphi 0, %s90
    %s105 = sphi 0, %s91
    %s109 = sphi 0, %s109
    %s111 = sphi 0, %s109
    %s112 = sphi 0, %s111
    %s126 = sphi 0, %s112
    %s130 = sphi 0, %s130
    %s132 = sphi 0, %s130
    %s133 = sphi 0, %s132
    %s147 = sphi 0, %s133
    %s153 = sphi 0, %s155
    %s156 = sphi 0, %s153
    %s157 = sphi 0, %s156
    %s173 = sphi 0, %s157
  $region4: #{traj_completor_forward.1} parent=0 // loop_header_branch
    %15 = sbr.rel (%p13) target = $region8
  $region5: #{traj_completor_forward.1} parent=0 // loop_body
    %s17 = ssub.s32 %s12, 1
    %s18 = ssub.s32 %s12, 2
    %s19 = sadd.s32 %s12, 1
    %s20 = ssub.s32 %s12, %s19
    %p21 = scmp.eq.s32.totalorder %s20, 0
    %s23 = sadd.s32 %s22, 1
    %s24 = scalar_select %p21, %s22, %s23
    %p27 = pneg %p21
    %p28 = scmp.eq.s32.totalorder %s12, 1
    %p29 = por %p27, %p28
    %p30 = scmp.ne.s32.totalorder %s22, %s25
    %p31 = scmp.eq.s32.totalorder %s12, 0
    %p32 = por %p30, %p31
    %p33 = scmp.ne.s32.totalorder %s22, %s25
    %p34 = scmp.eq.s32.totalorder %s17, 1
    %p35 = por %p33, %p34
    %p36 = scmp.ne.s32.totalorder %s25, %s26
    %p37 = scmp.eq.s32.totalorder %s17, 0
    %p38 = por %p36, %p37
    %p39 = scmp.ne.s32.totalorder %s25, %s26
    %p40 = scmp.eq.s32.totalorder %s18, 1
    %p41 = por %p39, %p40
    %p43 = scmp.ne.s32.totalorder %s26, %s42
    %p44 = scmp.eq.s32.totalorder %s18, 0
    %p45 = por %p43, %p44
    %s47 = sadd.s32 %s46, 1
    %p50 = scmp.eq.s32.totalorder %s12, 1
    %p51 = scmp.ne.s32.totalorder %s46, %s48
    %p52 = scmp.eq.s32.totalorder %s12, 0
    %p53 = por %p51, %p52
    %p54 = scmp.ne.s32.totalorder %s46, %s48
    %p55 = scmp.eq.s32.totalorder %s17, 1
    %p56 = por %p54, %p55
    %p57 = scmp.ne.s32.totalorder %s48, %s49
    %p58 = scmp.eq.s32.totalorder %s17, 0
    %p59 = por %p57, %p58
    %p60 = scmp.ne.s32.totalorder %s48, %s49
    %p61 = scmp.eq.s32.totalorder %s18, 1
    %p62 = por %p60, %p61
    %p64 = scmp.ne.s32.totalorder %s49, %s63
    %p65 = scmp.eq.s32.totalorder %s18, 0
    %p66 = por %p64, %p65
    %s68 = sadd.s32 %s67, 1
    %p71 = scmp.eq.s32.totalorder %s12, 1
    %p72 = scmp.ne.s32.totalorder %s67, %s69
    %p73 = scmp.eq.s32.totalorder %s12, 0
    %p74 = por %p72, %p73
    %p75 = scmp.ne.s32.totalorder %s67, %s69
    %p76 = scmp.eq.s32.totalorder %s17, 1
    %p77 = por %p75, %p76
    %p78 = scmp.ne.s32.totalorder %s69, %s70
    %p79 = scmp.eq.s32.totalorder %s17, 0
    %p80 = por %p78, %p79
    %p81 = scmp.ne.s32.totalorder %s69, %s70
    %p82 = scmp.eq.s32.totalorder %s18, 1
    %p83 = por %p81, %p82
    %p85 = scmp.ne.s32.totalorder %s70, %s84
    %p86 = scmp.eq.s32.totalorder %s18, 0
    %p87 = por %p85, %p86
    %s89 = sadd.s32 %s88, 1
    %p92 = scmp.eq.s32.totalorder %s12, 1
    %p93 = scmp.ne.s32.totalorder %s88, %s90
    %p94 = scmp.eq.s32.totalorder %s12, 0
    %p95 = por %p93, %p94
    %p96 = scmp.ne.s32.totalorder %s88, %s90
    %p97 = scmp.eq.s32.totalorder %s17, 1
    %p98 = por %p96, %p97
    %p99 = scmp.ne.s32.totalorder %s90, %s91
    %p100 = scmp.eq.s32.totalorder %s17, 0
    %p101 = por %p99, %p100
    %p102 = scmp.ne.s32.totalorder %s90, %s91
    %p103 = scmp.eq.s32.totalorder %s18, 1
    %p104 = por %p102, %p103
    %p106 = scmp.ne.s32.totalorder %s91, %s105
    %p107 = scmp.eq.s32.totalorder %s18, 0
    %p108 = por %p106, %p107
    %s110 = sadd.s32 %s109, 1
    %p113 = scmp.eq.s32.totalorder %s12, 1
    %p114 = scmp.ne.s32.totalorder %s109, %s111
    %p115 = scmp.eq.s32.totalorder %s12, 0
    %p116 = por %p114, %p115
    %p117 = scmp.ne.s32.totalorder %s109, %s111
    %p118 = scmp.eq.s32.totalorder %s17, 1
    %p119 = por %p117, %p118
    %p120 = scmp.ne.s32.totalorder %s111, %s112
    %p121 = scmp.eq.s32.totalorder %s17, 0
    %p122 = por %p120, %p121
    %p123 = scmp.ne.s32.totalorder %s111, %s112
    %p124 = scmp.eq.s32.totalorder %s18, 1
    %p125 = por %p123, %p124
    %p127 = scmp.ne.s32.totalorder %s112, %s126
    %p128 = scmp.eq.s32.totalorder %s18, 0
    %p129 = por %p127, %p128
    %s131 = sadd.s32 %s130, 1
    %p134 = scmp.eq.s32.totalorder %s12, 1
    %p135 = scmp.ne.s32.totalorder %s130, %s132
    %p136 = scmp.eq.s32.totalorder %s12, 0
    %p137 = por %p135, %p136
    %p138 = scmp.ne.s32.totalorder %s130, %s132
    %p139 = scmp.eq.s32.totalorder %s17, 1
    %p140 = por %p138, %p139
    %p141 = scmp.ne.s32.totalorder %s132, %s133
    %p142 = scmp.eq.s32.totalorder %s17, 0
    %p143 = por %p141, %p142
    %p144 = scmp.ne.s32.totalorder %s132, %s133
    %p145 = scmp.eq.s32.totalorder %s18, 1
    %p146 = por %p144, %p145
    %p148 = scmp.ne.s32.totalorder %s133, %s147
    %p149 = scmp.eq.s32.totalorder %s18, 0
    %p150 = por %p148, %p149
    %s151 = ssub.s32 %s12, %s19
    %p152 = scmp.eq.s32.totalorder %s151, 0
    %s154 = sadd.s32 %s153, 1
    %s155 = scalar_select %p152, %s153, %s154
    %p158 = pneg %p152
    %p159 = scmp.eq.s32.totalorder %s12, 1
    %p160 = por %p158, %p159
    %p161 = scmp.ne.s32.totalorder %s153, %s156
    %p162 = scmp.eq.s32.totalorder %s12, 0
    %p163 = por %p161, %p162
    %p164 = scmp.ne.s32.totalorder %s153, %s156
    %p165 = scmp.eq.s32.totalorder %s17, 1
    %p166 = por %p164, %p165
    %p167 = scmp.ne.s32.totalorder %s156, %s157
    %p168 = scmp.eq.s32.totalorder %s17, 0
    %p169 = por %p167, %p168
    %p170 = scmp.ne.s32.totalorder %s156, %s157
    %p171 = scmp.eq.s32.totalorder %s18, 1
    %p172 = por %p170, %p171
    %p174 = scmp.ne.s32.totalorder %s157, %s173
    %p175 = scmp.eq.s32.totalorder %s18, 0
    %p176 = por %p174, %p175
    %p177 = scmp.le.s32.totalorder 1, %s12
    %p178 = scmp.lt.s32.totalorder %s12, 3
    %p179 = pnand %p177, %p178
    %p180 = pneg %p179
    // Predicated region
    $region9: #{traj_completor_forward.1} parent=5 // pred_check
      _
    $region10: #{traj_completor_forward.1} parent=5 // pred_check_branch
      %182 = sbr.rel (%p179) target = $region12
    $region11: #{traj_completor_forward.1} parent=5 // pred_region
      %s183 = ssub.s32 %s12, 1
      // Predicated region
      $region13: #{traj_completor_forward.1} parent=11 // pred_check
        %p184 = pneg %p59
      $region14: #{traj_completor_forward.1} parent=11 // pred_check_branch
        %186 = sbr.rel (%p184) target = $region16
      $region15: #{traj_completor_forward.1} parent=11 // pred_region
        _
      $region16: #{traj_completor_forward.1} parent=11 // pred_fallthru
        _
      // Predicated region
      $region17: #{traj_completor_forward.1} parent=11 // pred_check
        %p187 = pneg %p80
      $region18: #{traj_completor_forward.1} parent=11 // pred_check_branch
        %189 = sbr.rel (%p187) target = $region20
      $region19: #{traj_completor_forward.1} parent=11 // pred_region
        _
      $region20: #{traj_completor_forward.1} parent=11 // pred_fallthru
        _
      // Predicated region
      $region21: #{traj_completor_forward.1} parent=11 // pred_check
        %p190 = pneg %p101
      $region22: #{traj_completor_forward.1} parent=11 // pred_check_branch
        %192 = sbr.rel (%p190) target = $region24
      $region23: #{traj_completor_forward.1} parent=11 // pred_region
        _
      $region24: #{traj_completor_forward.1} parent=11 // pred_fallthru
        _
      // Predicated region
      $region25: #{traj_completor_forward.1} parent=11 // pred_check
        %p193 = pneg %p122
      $region26: #{traj_completor_forward.1} parent=11 // pred_check_branch
        %195 = sbr.rel (%p193) target = $region28
      $region27: #{traj_completor_forward.1} parent=11 // pred_region
        _
      $region28: #{traj_completor_forward.1} parent=11 // pred_fallthru
        _
      // Predicated region
      $region29: #{traj_completor_forward.1} parent=11 // pred_check
        %p196 = pneg %p143
      $region30: #{traj_completor_forward.1} parent=11 // pred_check_branch
        %198 = sbr.rel (%p196) target = $region32
      $region31: #{traj_completor_forward.1} parent=11 // pred_region
        _
      $region32: #{traj_completor_forward.1} parent=11 // pred_fallthru
        _
    $region12: #{traj_completor_forward.1} parent=5 // pred_fallthru
      _
    %p199 = scmp.lt.s32.totalorder %s12, 2
    // Predicated region
    $region33: #{traj_completor_forward.1} parent=5 // pred_check
      %p200 = pneg %p199
    $region34: #{traj_completor_forward.1} parent=5 // pred_check_branch
      %202 = sbr.rel (%p200) target = $region36
    $region35: #{traj_completor_forward.1} parent=5 // pred_region
      // Predicated region
      $region37: #{traj_completor_forward.1} parent=35 // pred_check
        %p203 = pneg %p32
      $region38: #{traj_completor_forward.1} parent=35 // pred_check_branch
        %205 = sbr.rel (%p203) target = $region40
      $region39: #{traj_completor_forward.1} parent=35 // pred_region
        %p206 = scmp.lt.s32.totalorder %s12, 1
        %s207 = scalar_select %p206, %s12, 1
        %s208 = smul.addr %s207, 2
        %s209 = smul.addr %s208, 4
        %s210 = scalar_lea.vmem %s0, %s209
      $region40: #{traj_completor_forward.1} parent=35 // pred_fallthru
        _
    $region36: #{traj_completor_forward.1} parent=5 // pred_fallthru
      _
    %p211 = scmp.le.s32.totalorder 1, %s12
    %p212 = scmp.lt.s32.totalorder %s12, 3
    %p213 = pnand %p211, %p212
    %p214 = pneg %p213
    // Predicated region
    $region41: #{traj_completor_forward.1} parent=5 // pred_check
      _
    $region42: #{traj_completor_forward.1} parent=5 // pred_check_branch
      %216 = sbr.rel (%p213) target = $region44
    $region43: #{traj_completor_forward.1} parent=5 // pred_region
      %s217 = ssub.s32 %s12, 1
      %p218 = scmp.lt.s32.totalorder %s17, 1
      %s219 = scalar_select %p218, %s17, 1
      %s220 = smul.addr %s219, 2
      %s221 = smul.addr %s220, 4
      %s222 = scalar_lea.vmem %s0, %s221
      %p223 = pneg %p38
      %p224 = pneg %p35
      %p225 = pneg %p59
      %p226 = pneg %p56
      %p227 = pneg %p80
      %p228 = pneg %p77
      %p229 = pneg %p101
      %p230 = pneg %p98
      %p231 = pneg %p122
      %p232 = pneg %p119
      %p233 = pneg %p143
      %p234 = pneg %p140
      %p235 = pneg %p169
      %p236 = pneg %p166
      %p237 = scmp.lt.s32.totalorder %s17, 1
      %s238 = scalar_select %p237, %s17, 1
      %s239 = smul.addr %s238, 2
      %s240 = smul.addr %s239, 8
      %s241 = scalar_lea.vmem %s6, %s240
      %p242 = scmp.lt.s32.totalorder %s17, 1
      %s243 = scalar_select %p242, %s17, 1
      %s244 = smul.addr %s243, 2
      %s245 = smul.addr %s244, 4
      %s246 = scalar_lea.vmem %s0, %s245
      %p247 = scmp.lt.s32.totalorder %s17, 1
      %s248 = scalar_select %p247, %s17, 1
      %s249 = smul.addr %s248, 2
      %s250 = smul.addr %s249, 8
      %s251 = scalar_lea.vmem %s6, %s250
      %v253 = vld [vmem:[%s246] sm:$0xff]
      %v255 = vrot.slane %v253, 4
      %v257 = vunpack.c.l.bf16 %v255
      %v258 = vld [vmem:[%s2] sm:$0x77]
      %v259 = vld [vmem:[%s1] sm:$0xff]
      %v260 = vld [vmem:[%s1 + $0x8] sm:$0xff]
      %v261 = vld [vmem:[%s1 + $0x10] sm:$0xff]
      %v262 = vld [vmem:[%s1 + $0x18] sm:$0xff]
      %v263 = vld [vmem:[%s1 + $0x20] sm:$0xff]
      %v264 = vld [vmem:[%s1 + $0x28] sm:$0xff]
      %v265 = vld [vmem:[%s1 + $0x30] sm:$0xff]
      %v266 = vld [vmem:[%s1 + $0x38] sm:$0xff]
      %v267 = vld [vmem:[%s1 + $0x40] sm:$0xff]
      %v268 = vld [vmem:[%s1 + $0x48] sm:$0xff]
      %v269 = vld [vmem:[%s1 + $0x50] sm:$0xff]
      %v270 = vld [vmem:[%s1 + $0x58] sm:$0xff]
      %v271 = vld [vmem:[%s1 + $0x60] sm:$0xff]
      %v272 = vld [vmem:[%s1 + $0x68] sm:$0xff]
      %v273 = vld [vmem:[%s1 + $0x70] sm:$0xff]
      %v274 = vld [vmem:[%s1 + $0x78] sm:$0xff]
      %v276 = vlaneseq
      %v277 = vshrl.u32 %v276, 7
      %v278 = vsub.s32 0, %v277
      %v279 = vrot.slane %v258, %v278
      %v280 = vlaneseq
      %v281 = vshrl.u32 %v280, 7
      %v282 = vsub.s32 4, %v281
      %v283 = vrot.slane %v258, %v282
      %v286 = vlaneseq
      %v287 = vshrl.u32 %v286, 7
      %v288 = vsub.s32 0, %v287
      %v289 = vrot.slane %v279, %v288
      %v290 = vlaneseq
      %v291 = vshrl.u32 %v290, 7
      %v292 = vsub.s32 0, %v291
      %v293 = vrot.slane %v283, %v292
      %v310 = vunpack.c.l.b16 %v259
      %v311 = vunpack.c.h.b16 %v259
      %v312 = vunpack.c.l.b16 %v260
      %v313 = vunpack.c.h.b16 %v260
      %v314 = vunpack.c.l.b16 %v261
      %v315 = vunpack.c.h.b16 %v261
      %v316 = vunpack.c.l.b16 %v262
      %v317 = vunpack.c.h.b16 %v262
      %v318 = vunpack.c.l.b16 %v263
      %v319 = vunpack.c.h.b16 %v263
      %v320 = vunpack.c.l.b16 %v264
      %v321 = vunpack.c.h.b16 %v264
      %v322 = vunpack.c.l.b16 %v265
      %v323 = vunpack.c.h.b16 %v265
      %v324 = vunpack.c.l.b16 %v266
      %v325 = vunpack.c.h.b16 %v266
      %v326 = vunpack.c.l.b16 %v267
      %v327 = vunpack.c.h.b16 %v267
      %v328 = vunpack.c.l.b16 %v268
      %v329 = vunpack.c.h.b16 %v268
      %v330 = vunpack.c.l.b16 %v269
      %v331 = vunpack.c.h.b16 %v269
      %v332 = vunpack.c.l.b16 %v270
      %v333 = vunpack.c.h.b16 %v270
      %v334 = vunpack.c.l.b16 %v271
      %v335 = vunpack.c.h.b16 %v271
      %v336 = vunpack.c.l.b16 %v272
      %v337 = vunpack.c.h.b16 %v272
      %v338 = vunpack.c.l.b16 %v273
      %v339 = vunpack.c.h.b16 %v273
      %v340 = vunpack.c.l.b16 %v274
      %v341 = vunpack.c.h.b16 %v274
      %v342 = vpack.c.b16 %v312, %v310
      %v343 = vpack.c.b16 %v313, %v311
      %v344 = vpack.c.b16 %v316, %v314
      %v345 = vpack.c.b16 %v317, %v315
      %v346 = vpack.c.b16 %v320, %v318
      %v347 = vpack.c.b16 %v321, %v319
      %v348 = vpack.c.b16 %v324, %v322
      %v349 = vpack.c.b16 %v325, %v323
      %v350 = vpack.c.b16 %v328, %v326
      %v351 = vpack.c.b16 %v329, %v327
      %v352 = vpack.c.b16 %v332, %v330
      %v353 = vpack.c.b16 %v333, %v331
      %v354 = vpack.c.b16 %v336, %v334
      %v355 = vpack.c.b16 %v337, %v335
      %v356 = vpack.c.b16 %v340, %v338
      %v357 = vpack.c.b16 %v341, %v339
      %374 = vmatprep.subr.bf16.mxu0 %v357
      %375 = vmatpush1.bf16.msra.mxu0 %v356
      %376 = vmatprep.subr.bf16.mxu0 %v355
      %377 = vmatpush1.bf16.msra.mxu0 %v354
      %378 = vmatprep.subr.bf16.mxu0 %v353
      %379 = vmatpush1.bf16.msra.mxu0 %v352
      %380 = vmatprep.subr.bf16.mxu0 %v351
      %381 = vmatpush1.bf16.msra.mxu0 %v350
      %382 = vmatprep.subr.bf16.mxu0 %v349
      %383 = vmatpush1.bf16.msra.mxu0 %v348
      %384 = vmatprep.subr.bf16.mxu0 %v347
      %385 = vmatpush1.bf16.msra.mxu0 %v346
      %386 = vmatprep.subr.bf16.mxu0 %v345
      %387 = vmatpush1.bf16.msra.mxu0 %v344
      %388 = vmatprep.subr.bf16.mxu0 %v343
      %389 = vmatpush1.bf16.msra.mxu0 %v342
      %390 = vmatprep.subr.bf16.mxu0 0
      %391 = vmatpush2.bf16.msra.mxu0 0
      %392 = vmatprep.subr.bf16.mxu0 0
      %393 = vmatpush2.bf16.msra.mxu0 0
      %394 = vmatprep.subr.bf16.mxu0 0
      %395 = vmatpush2.bf16.msra.mxu0 0
      %396 = vmatprep.subr.bf16.mxu0 0
      %397 = vmatpush2.bf16.msra.mxu0 0
      %398 = vmatprep.subr.bf16.mxu0 0
      %399 = vmatpush2.bf16.msra.mxu0 0
      %400 = vmatprep.subr.bf16.mxu0 0
      %401 = vmatpush2.bf16.msra.mxu0 0
      %402 = vmatprep.subr.bf16.mxu0 0
      %403 = vmatpush2.bf16.msra.mxu0 0
      %404 = vmatprep.subr.bf16.mxu0 0
      %405 = vmatpush2.bf16.msra.mxu0 0
      %406 = vmatprep.mubr.bf16.mxu0 0
      %407 = vmatmul.mubr.bf16.gmra.mxu0 %v253
      %v408 = vpop.f32.mrf.mxu0
      %v409 = vadd.f32 %v289, %v408
      %v410 = vpop.f32.mrf.mxu0
      %v411 = vadd.f32 %v293, %v410
      %v412 = vpop.f32.mrf.mxu0
      %v413 = vpop.f32.mrf.mxu0
      %414 = vdwg.mxu0
      %416 = vset.pattern.permute.xlu0 0
      %417 = vperm.xlu0 %416, %v257
      %v418 = vpop.permute.xlu0 %417
      %v420 = vlaneseq
      %v421 = vshrl.u32 %v420, 7
      %v422 = vsub.s32 1, %v421
      %v423 = vrot.slane %v258, %v422
      %v424 = vlaneseq
      %v425 = vshrl.u32 %v424, 7
      %v426 = vsub.s32 5, %v425
      %v427 = vrot.slane %v258, %v426
      %v430 = vlaneseq
      %v431 = vshrl.u32 %v430, 7
      %v432 = vsub.s32 1, %v431
      %v433 = vrot.slane %v423, %v432
      %v434 = vlaneseq
      %v435 = vshrl.u32 %v434, 7
      %v436 = vsub.s32 1, %v435
      %v437 = vrot.slane %v427, %v436
      %v438 = vmul.f32 %v418, %v433
      %v439 = vmul.f32 %v418, %v437
      %v440 = vadd.f32 %v409, %v438
      %v441 = vadd.f32 %v411, %v439
      %442 = vset.pattern.permute.xlu0 1
      %443 = vperm.xlu0 %442, %v257
      %v444 = vpop.permute.xlu0 %443
      %v446 = vlaneseq
      %v447 = vshrl.u32 %v446, 7
      %v448 = vsub.s32 2, %v447
      %v449 = vrot.slane %v258, %v448
      %v450 = vlaneseq
      %v451 = vshrl.u32 %v450, 7
      %v452 = vsub.s32 6, %v451
      %v453 = vrot.slane %v258, %v452
      %v456 = vlaneseq
      %v457 = vshrl.u32 %v456, 7
      %v458 = vsub.s32 2, %v457
      %v459 = vrot.slane %v449, %v458
      %v460 = vlaneseq
      %v461 = vshrl.u32 %v460, 7
      %v462 = vsub.s32 2, %v461
      %v463 = vrot.slane %v453, %v462
      %v464 = vmul.f32 %v444, %v459
      %v465 = vmul.f32 %v444, %v463
      %v466 = vadd.f32 %v440, %v464
      %v467 = vadd.f32 %v441, %v465
      %v468 = vld [vmem:[%s3] sm:$0xff]
      %469 = vadd.xlane.f32.xlu0 %v466
      %v470 = vpop.xlane.xlu0 %469
      %v471 = vrcp.pop 128.0
      %v472 = vmul.f32 %v470, %v471
      %v473 = vmul.f32 %v466, %v466
      %474 = vadd.xlane.f32.xlu0 %v473
      %v475 = vpop.xlane.xlu0 %474
      %v476 = vmul.f32 %v475, %v471
      %v477 = vmul.f32 %v472, %v472
      %v478 = vsub.f32 %v476, %v477
      %v479 = vmax.f32 %v478, 0.0
      %v480 = vsub.f32 %v466, %v472
      %v481 = vadd.f32 %v479, 1e-05
      %v482 = vrsqrt.pop %v481
      %v483 = vmul.f32 %v480, %v482
      %v484 = vlaneseq
      %v485 = vshrl.u32 %v484, 7
      %v486 = vsub.s32 0, %v485
      %v487 = vrot.slane %v468, %v486
      %v488 = vmul.f32 %v483, %v487
      %v489 = vlaneseq
      %v490 = vshrl.u32 %v489, 7
      %v491 = vsub.s32 1, %v490
      %v492 = vrot.slane %v468, %v491
      %v493 = vadd.f32 %v488, %v492
      %v494 = vmax.f32 %v493, 0.0
      %v495 = vpack.c.bf16 %v494, %v494
      %v496 = vld [vmem:[%s4] sm:$0xf]
      %v497 = vld [vmem:[%s4 + $0x4] sm:$0xf]
      %v498 = vld [vmem:[%s4 + $0x8] sm:$0xf]
      %v499 = vld [vmem:[%s4 + $0xc] sm:$0xf]
      %v500 = vld [vmem:[%s4 + $0x10] sm:$0xf]
      %v501 = vld [vmem:[%s4 + $0x14] sm:$0xf]
      %v502 = vld [vmem:[%s4 + $0x18] sm:$0xf]
      %v503 = vld [vmem:[%s4 + $0x1c] sm:$0xf]
      %v504 = vld [vmem:[%s4 + $0x20] sm:$0xf]
      %v505 = vld [vmem:[%s4 + $0x24] sm:$0xf]
      %v506 = vld [vmem:[%s4 + $0x28] sm:$0xf]
      %v507 = vld [vmem:[%s4 + $0x2c] sm:$0xf]
      %v508 = vld [vmem:[%s4 + $0x30] sm:$0xf]
      %v509 = vld [vmem:[%s4 + $0x34] sm:$0xf]
      %v510 = vld [vmem:[%s4 + $0x38] sm:$0xf]
      %v511 = vld [vmem:[%s4 + $0x3c] sm:$0xf]
      %v512 = vlaneseq
      %v513 = vshrl.u32 %v512, 7
      %v514 = vsub.s32 2, %v513
      %v515 = vrot.slane %v468, %v514
      %v532 = vunpack.c.l.b16 %v496
      %v533 = vunpack.c.l.b16 %v497
      %v534 = vunpack.c.l.b16 %v498
      %v535 = vunpack.c.l.b16 %v499
      %v536 = vunpack.c.l.b16 %v500
      %v537 = vunpack.c.l.b16 %v501
      %v538 = vunpack.c.l.b16 %v502
      %v539 = vunpack.c.l.b16 %v503
      %v540 = vunpack.c.l.b16 %v504
      %v541 = vunpack.c.l.b16 %v505
      %v542 = vunpack.c.l.b16 %v506
      %v543 = vunpack.c.l.b16 %v507
      %v544 = vunpack.c.l.b16 %v508
      %v545 = vunpack.c.l.b16 %v509
      %v546 = vunpack.c.l.b16 %v510
      %v547 = vunpack.c.l.b16 %v511
      %v548 = vpack.c.b16 %v533, %v532
      %v549 = vpack.c.b16 %v535, %v534
      %v550 = vpack.c.b16 %v537, %v536
      %v551 = vpack.c.b16 %v539, %v538
      %v552 = vpack.c.b16 %v541, %v540
      %v553 = vpack.c.b16 %v543, %v542
      %v554 = vpack.c.b16 %v545, %v544
      %v555 = vpack.c.b16 %v547, %v546
      %564 = vmatprep.subr.bf16.mxu0 0
      %565 = vmatpush1.bf16.msra.mxu0 %v555
      %566 = vmatprep.subr.bf16.mxu0 0
      %567 = vmatpush1.bf16.msra.mxu0 %v554
      %568 = vmatprep.subr.bf16.mxu0 0
      %569 = vmatpush1.bf16.msra.mxu0 %v553
      %570 = vmatprep.subr.bf16.mxu0 0
      %571 = vmatpush1.bf16.msra.mxu0 %v552
      %572 = vmatprep.subr.bf16.mxu0 0
      %573 = vmatpush1.bf16.msra.mxu0 %v551
      %574 = vmatprep.subr.bf16.mxu0 0
      %575 = vmatpush1.bf16.msra.mxu0 %v550
      %576 = vmatprep.subr.bf16.mxu0 0
      %577 = vmatpush1.bf16.msra.mxu0 %v549
      %578 = vmatprep.subr.bf16.mxu0 0
      %579 = vmatpush1.bf16.msra.mxu0 %v548
      %580 = vmatprep.subr.bf16.mxu0 0
      %581 = vmatpush2.bf16.msra.mxu0 0
      %582 = vmatprep.subr.bf16.mxu0 0
      %583 = vmatpush2.bf16.msra.mxu0 0
      %584 = vmatprep.subr.bf16.mxu0 0
      %585 = vmatpush2.bf16.msra.mxu0 0
      %586 = vmatprep.subr.bf16.mxu0 0
      %587 = vmatpush2.bf16.msra.mxu0 0
      %588 = vmatprep.subr.bf16.mxu0 0
      %589 = vmatpush2.bf16.msra.mxu0 0
      %590 = vmatprep.subr.bf16.mxu0 0
      %591 = vmatpush2.bf16.msra.mxu0 0
      %592 = vmatprep.subr.bf16.mxu0 0
      %593 = vmatpush2.bf16.msra.mxu0 0
      %594 = vmatprep.subr.bf16.mxu0 0
      %595 = vmatpush2.bf16.msra.mxu0 0
      %596 = vmatprep.mubr.bf16.mxu0 0
      %597 = vmatmul.mubr.bf16.gmra.mxu0 %v495
      %v598 = vpop.f32.mrf.mxu0
      %v599 = vadd.f32 %v515, %v598
      %v600 = vpop.f32.mrf.mxu0
      %v601 = vpop.f32.mrf.mxu0
      %v602 = vpop.f32.mrf.mxu0
      %603 = vdwg.mxu0
      %604 = vadd.xlane.f32.xlu0 %v599
      %v605 = vpop.xlane.xlu0 %604
      %v606 = vmul.f32 %v605, %v471
      %v607 = vmul.f32 %v599, %v599
      %608 = vadd.xlane.f32.xlu0 %v607
      %v609 = vpop.xlane.xlu0 %608
      %v610 = vmul.f32 %v609, %v471
      %v611 = vmul.f32 %v606, %v606
      %v612 = vsub.f32 %v610, %v611
      %v613 = vmax.f32 %v612, 0.0
      %v614 = vsub.f32 %v599, %v606
      %v615 = vadd.f32 %v613, 1e-05
      %v616 = vrsqrt.pop %v615
      %v617 = vmul.f32 %v614, %v616
      %v618 = vlaneseq
      %v619 = vshrl.u32 %v618, 7
      %v620 = vsub.s32 3, %v619
      %v621 = vrot.slane %v468, %v620
      %v622 = vmul.f32 %v617, %v621
      %v623 = vlaneseq
      %v624 = vshrl.u32 %v623, 7
      %v625 = vsub.s32 4, %v624
      %v626 = vrot.slane %v468, %v625
      %v627 = vadd.f32 %v622, %v626
      %628 = vadd.xlane.f32.xlu0 %v467
      %v629 = vpop.xlane.xlu0 %628
      %v630 = vmul.f32 %v629, %v471
      %v631 = vmul.f32 %v467, %v467
      %632 = vadd.xlane.f32.xlu0 %v631
      %v633 = vpop.xlane.xlu0 %632
      %v634 = vmul.f32 %v633, %v471
      %v635 = vmul.f32 %v630, %v630
      %v636 = vsub.f32 %v634, %v635
      %v637 = vmax.f32 %v636, 0.0
      %v638 = vsub.f32 %v467, %v630
      %v639 = vadd.f32 %v637, 1e-05
      %v640 = vrsqrt.pop %v639
      %v641 = vmul.f32 %v638, %v640
      %v642 = vlaneseq
      %v643 = vshrl.u32 %v642, 7
      %v644 = vsub.s32 5, %v643
      %v645 = vrot.slane %v468, %v644
      %v646 = vmul.f32 %v641, %v645
      %v647 = vlaneseq
      %v648 = vshrl.u32 %v647, 7
      %v649 = vsub.s32 6, %v648
      %v650 = vrot.slane %v468, %v649
      %v651 = vadd.f32 %v646, %v650
      %v652 = vadd.f32 %v627, %v651
      %v653 = vmax.f32 %v652, 0.0
      %v654 = vpack.c.bf16 %v653, %v653
      %v655 = vld [vmem:[%s5] sm:$0xff]
      %v656 = vld [vmem:[%s5 + $0x8] sm:$0xff]
      %v657 = vld [vmem:[%s5 + $0x10] sm:$0xff]
      %v658 = vld [vmem:[%s5 + $0x18] sm:$0xff]
      %v659 = vld [vmem:[%s5 + $0x20] sm:$0xff]
      %v660 = vld [vmem:[%s5 + $0x28] sm:$0xff]
      %v661 = vld [vmem:[%s5 + $0x30] sm:$0xff]
      %v662 = vld [vmem:[%s5 + $0x38] sm:$0xff]
      %v663 = vld [vmem:[%s5 + $0x40] sm:$0xff]
      %v664 = vld [vmem:[%s5 + $0x48] sm:$0xff]
      %v665 = vld [vmem:[%s5 + $0x50] sm:$0xff]
      %v666 = vld [vmem:[%s5 + $0x58] sm:$0xff]
      %v667 = vld [vmem:[%s5 + $0x60] sm:$0xff]
      %v668 = vld [vmem:[%s5 + $0x68] sm:$0xff]
      %v669 = vld [vmem:[%s5 + $0x70] sm:$0xff]
      %v670 = vld [vmem:[%s5 + $0x78] sm:$0xff]
      %v687 = vunpack.c.l.b16 %v655
      %v688 = vunpack.c.h.b16 %v655
      %v689 = vunpack.c.l.b16 %v656
      %v690 = vunpack.c.h.b16 %v656
      %v691 = vunpack.c.l.b16 %v657
      %v692 = vunpack.c.h.b16 %v657
      %v693 = vunpack.c.l.b16 %v658
      %v694 = vunpack.c.h.b16 %v658
      %v695 = vunpack.c.l.b16 %v659
      %v696 = vunpack.c.h.b16 %v659
      %v697 = vunpack.c.l.b16 %v660
      %v698 = vunpack.c.h.b16 %v660
      %v699 = vunpack.c.l.b16 %v661
      %v700 = vunpack.c.h.b16 %v661
      %v701 = vunpack.c.l.b16 %v662
      %v702 = vunpack.c.h.b16 %v662
      %v703 = vunpack.c.l.b16 %v663
      %v704 = vunpack.c.h.b16 %v663
      %v705 = vunpack.c.l.b16 %v664
      %v706 = vunpack.c.h.b16 %v664
      %v707 = vunpack.c.l.b16 %v665
      %v708 = vunpack.c.h.b16 %v665
      %v709 = vunpack.c.l.b16 %v666
      %v710 = vunpack.c.h.b16 %v666
      %v711 = vunpack.c.l.b16 %v667
      %v712 = vunpack.c.h.b16 %v667
      %v713 = vunpack.c.l.b16 %v668
      %v714 = vunpack.c.h.b16 %v668
      %v715 = vunpack.c.l.b16 %v669
      %v716 = vunpack.c.h.b16 %v669
      %v717 = vunpack.c.l.b16 %v670
      %v718 = vunpack.c.h.b16 %v670
      %v719 = vpack.c.b16 %v689, %v687
      %v720 = vpack.c.b16 %v690, %v688
      %v721 = vpack.c.b16 %v693, %v691
      %v722 = vpack.c.b16 %v694, %v692
      %v723 = vpack.c.b16 %v697, %v695
      %v724 = vpack.c.b16 %v698, %v696
      %v725 = vpack.c.b16 %v701, %v699
      %v726 = vpack.c.b16 %v702, %v700
      %v727 = vpack.c.b16 %v705, %v703
      %v728 = vpack.c.b16 %v706, %v704
      %v729 = vpack.c.b16 %v709, %v707
      %v730 = vpack.c.b16 %v710, %v708
      %v731 = vpack.c.b16 %v713, %v711
      %v732 = vpack.c.b16 %v714, %v712
      %v733 = vpack.c.b16 %v717, %v715
      %v734 = vpack.c.b16 %v718, %v716
      %751 = vmatprep.subr.bf16.mxu0 %v734
      %752 = vmatpush1.bf16.msra.mxu0 %v733
      %753 = vmatprep.subr.bf16.mxu0 %v732
      %754 = vmatpush1.bf16.msra.mxu0 %v731
      %755 = vmatprep.subr.bf16.mxu0 %v730
      %756 = vmatpush1.bf16.msra.mxu0 %v729
      %757 = vmatprep.subr.bf16.mxu0 %v728
      %758 = vmatpush1.bf16.msra.mxu0 %v727
      %759 = vmatprep.subr.bf16.mxu0 %v726
      %760 = vmatpush1.bf16.msra.mxu0 %v725
      %761 = vmatprep.subr.bf16.mxu0 %v724
      %762 = vmatpush1.bf16.msra.mxu0 %v723
      %763 = vmatprep.subr.bf16.mxu0 %v722
      %764 = vmatpush1.bf16.msra.mxu0 %v721
      %765 = vmatprep.subr.bf16.mxu0 %v720
      %766 = vmatpush1.bf16.msra.mxu0 %v719
      %767 = vmatprep.subr.bf16.mxu0 0
      %768 = vmatpush2.bf16.msra.mxu0 0
      %769 = vmatprep.subr.bf16.mxu0 0
      %770 = vmatpush2.bf16.msra.mxu0 0
      %771 = vmatprep.subr.bf16.mxu0 0
      %772 = vmatpush2.bf16.msra.mxu0 0
      %773 = vmatprep.subr.bf16.mxu0 0
      %774 = vmatpush2.bf16.msra.mxu0 0
      %775 = vmatprep.subr.bf16.mxu0 0
      %776 = vmatpush2.bf16.msra.mxu0 0
      %777 = vmatprep.subr.bf16.mxu0 0
      %778 = vmatpush2.bf16.msra.mxu0 0
      %779 = vmatprep.subr.bf16.mxu0 0
      %780 = vmatpush2.bf16.msra.mxu0 0
      %781 = vmatprep.subr.bf16.mxu0 0
      %782 = vmatpush2.bf16.msra.mxu0 0
      %783 = vmatprep.mubr.bf16.mxu0 0
      %784 = vmatmul.mubr.bf16.gmra.mxu0 %v654
      %v785 = vpop.f32.mrf.mxu0
      %v786 = vadd.f32 0.0, %v785
      %v787 = vpop.f32.mrf.mxu0
      %v788 = vadd.f32 0.0, %v787
      %v789 = vpop.f32.mrf.mxu0
      %v790 = vpop.f32.mrf.mxu0
      %791 = vdwg.mxu0
      %v792 = vlaneseq
      %v793 = vand.u32 %v792, 127
      %v794 = vadd.s32 %v793, 128
      %vm795 = vcmp.lt.s32.totalorder %v793, 0
      %v796 = vsub.s32 0, %v793
      %v797 = vsel %vm795, %v796, %v793
      %v798 = vmul.u32.u64.compose %v797, 3435973837
      %v799 = vextract.low.u32 %v798
      %v800 = vextract.high.u32 %v798
      %v801 = vshrl.u32 %v800, 2
      %v802 = vmul.u32 %v801, 5
      %v803 = vsub.s32 %v797, %v802
      %v804 = vsub.s32 0, %v803
      %v805 = vsel %vm795, %v804, %v803
      %vm806 = vcmp.lt.s32.totalorder %v794, 0
      %v807 = vsub.s32 0, %v794
      %v808 = vsel %vm806, %v807, %v794
      %v809 = vmul.u32.u64.compose %v808, 3435973837
      %v810 = vextract.low.u32 %v809
      %v811 = vextract.high.u32 %v809
      %v812 = vshrl.u32 %v811, 2
      %v813 = vmul.u32 %v812, 5
      %v814 = vsub.s32 %v808, %v813
      %v815 = vsub.s32 0, %v814
      %v816 = vsel %vm806, %v815, %v814
      %vm817 = vcmp.ne.s32.totalorder %v805, 0
      %vm818 = vcmp.ne.s32.totalorder %v816, 0
      %vm819 = vcmp.lt.s32.totalorder %v805, 0
      %vm820 = vcmp.lt.s32.totalorder %v816, 0
      %vm821 = vmand %vm819, %vm817
      %vm822 = vmand %vm820, %vm818
      %v823 = vadd.s32 %v805, 5
      %v824 = vadd.s32 %v816, 5
      %v825 = vsel %vm821, %v823, %v805
      %v826 = vsel %vm822, %v824, %v816
      %vm827 = vcmp.eq.s32.totalorder %v825, 4
      %vm828 = vcmp.eq.s32.totalorder %v826, 4
      %v829 = vmul.f32 %v786, 2.0
      %v830 = vmul.f32 %v788, 2.0
      %v831 = vmax.f32 %v829, -60.0
      %v832 = vmax.f32 %v830, -60.0
      %v833 = vmin.f32 %v831, 60.0
      %v834 = vmin.f32 %v832, 60.0
      %v835 = vsel %vm827, %v833, %v786
      %v836 = vsel %vm828, %v834, %v788
      %v837 = vmul.f32 %v835, 1.442695
      %v838 = vpow.pop %v837
      %v839 = vmul.f32 %v836, 1.442695
      %v840 = vpow.pop %v839
      %v841 = vadd.f32 %v838, 1.0
      %v842 = vadd.f32 %v840, 1.0
      %v843 = vrcp.pop %v841
      %v844 = vrcp.pop %v842
      %v845 = vmul.f32 %v843, 2.0
      %v846 = vmul.f32 %v844, 2.0
      %v847 = vsub.f32 1.0, %v845
      %v848 = vsub.f32 1.0, %v846
      %vm849 = vcmp.lt.s32.totalorder %v825, 2
      %vm850 = vcmp.lt.s32.totalorder %v826, 2
      %vm851 = vcmp.lt.s32.totalorder %v825, 4
      %vm852 = vcmp.lt.s32.totalorder %v826, 4
      %v853 = vsel %vm851, %v838, %v847
      %v854 = vsel %vm852, %v840, %v848
      %v855 = vsel %vm849, %v786, %v853
      %v856 = vsel %vm850, %v788, %v854
      %857 = vst [vmem:[%s251] sm:$0xff] %v855
      %vm858 = vcmask 179200
      %859 = vst.msk [vmem:[%s251 + $0x8] sm:$0xff] %vm858, %v856
      %p860 = scmp.lt.s32.totalorder %s17, 1
      %s861 = scalar_select %p860, %s17, 1
      %s862 = smul.addr %s861, 2
      %s863 = smul.addr %s862, 8
      %s864 = scalar_lea.vmem %s6, %s863
      // Predicated region
      $region45: #{traj_completor_forward.1} parent=43 // pred_check
        %p865 = pneg %p166
      $region46: #{traj_completor_forward.1} parent=43 // pred_check_branch
        %867 = sbr.rel (%p865) target = $region48
      $region47: #{traj_completor_forward.1} parent=43 // pred_region
        _
      $region48: #{traj_completor_forward.1} parent=43 // pred_fallthru
        _
    $region44: #{traj_completor_forward.1} parent=5 // pred_fallthru
      _
    %p868 = scmp.le.s32.totalorder 2, %s12
    // Predicated region
    $region49: #{traj_completor_forward.1} parent=5 // pred_check
      %p869 = pneg %p868
    $region50: #{traj_completor_forward.1} parent=5 // pred_check_branch
      %871 = sbr.rel (%p869) target = $region52
    $region51: #{traj_completor_forward.1} parent=5 // pred_region
      %s872 = ssub.s32 %s12, 2
      // Predicated region
      $region53: #{traj_completor_forward.1} parent=51 // pred_check
        %p873 = pneg %p172
      $region54: #{traj_completor_forward.1} parent=51 // pred_check_branch
        %875 = sbr.rel (%p873) target = $region56
      $region55: #{traj_completor_forward.1} parent=51 // pred_region
        %p876 = scmp.lt.s32.totalorder %s18, 1
        %s877 = scalar_select %p876, %s18, 1
        %s878 = smul.addr %s877, 2
        %s879 = smul.addr %s878, 8
        %s880 = scalar_lea.vmem %s6, %s879
      $region56: #{traj_completor_forward.1} parent=51 // pred_fallthru
        _
    $region52: #{traj_completor_forward.1} parent=5 // pred_fallthru
      _
  $region6: #{traj_completor_forward.1} parent=0 // loop_footer
    %s16 = sadd.s32 1, %s12
  $region7: #{traj_completor_forward.1} parent=0 // loop_footer_branch
    %11 = sbr.rel target = $region3
  $region8: #{traj_completor_forward.1} parent=0 // loop_exit
    _

</llo_original>
